<compile_context>
chip_gen: v6e
topology: v6e:2x2x1
jax: 0.10.0
libtpu: 0.0.40
codegen_flags: <defaults>
</compile_context>

<pallas_src>
import functools

import jax
import jax.numpy as jnp
from jax.experimental import pallas as pl
from jax.experimental.pallas import tpu as pltpu


def _vq_kernel(z_ref, eaug_ref, et_ref, zq_ref, idx_ref, mind_ref, zaug_ref):
    """One (batch, spatial-tile) step of the VQ codebook lookup.

    Shapes (D = embedding dim, K = codebook size, tn = spatial tile):
      z_ref    : (1, D, tn)   encoder activations, channel-major (NCHW slab)
      eaug_ref : (K, D+1)     [-2*e | ||e||^2]     (resident, single-buffered)
      et_ref   : (D, K)       codebook transposed  (resident, single-buffered)
      zq_ref   : (1, D, tn)   quantized activations (lane-dense store)
      idx_ref  : (1, 1, tn)   nearest-code indices  (lane-dense store)
      mind_ref : (1, 1, 128)  per-tile sum of min squared distances (lane 0)
      zaug_ref : (D+1, tn)    VMEM scratch holding [z ; 1]
    """
    D = z_ref.shape[1]
    tn = z_ref.shape[2]
    K = eaug_ref.shape[0]

    z = z_ref[0].astype(jnp.float32)                              # (D, tn)

    # Assemble z_aug = [z ; ones] in scratch so a single MXU matmul produces
    # ||e_k||^2 - 2 e_k . z_n  (argmin-equivalent to the full distance).
    zaug_ref[pl.ds(0, D), :] = z
    zaug_ref[pl.ds(D, 1), :] = jnp.ones((1, tn), jnp.float32)
    z_aug = zaug_ref[...]                                         # (D+1, tn)

    dist_core = jnp.dot(eaug_ref[...], z_aug,
                        preferred_element_type=jnp.float32)       # (K, tn)

    # argmin over the codebook axis, first-occurrence tie-break.
    # TODO(synk): collapse to a single index-carrying reduction (jnp.argmin)
    # once its Mosaic lowering is verified on the target jaxlib.
    min_core = jnp.min(dist_core, axis=0, keepdims=True)          # (1, tn)
    row_ids = jax.lax.broadcasted_iota(jnp.int32, (K, tn), 0)
    masked = jnp.where(dist_core == min_core, row_ids, K)         # (K, tn)
    idx = jnp.min(masked, axis=0, keepdims=True).astype(jnp.int32)  # (1, tn)
    idx_ref[0] = idx

    # Codebook gather as a one-hot matmul; `masked == idx` is true only at the
    # first-occurrence minimum, so ties never double-count.  The result is
    # already in the (D, tn) NCHW-slab layout: no transpose anywhere.
    one_hot = (masked == idx).astype(jnp.float32)                 # (K, tn)
    z_q = jnp.dot(et_ref[...], one_hot,
                  preferred_element_type=jnp.float32)             # (D, tn)
    zq_ref[0] = z_q.astype(zq_ref.dtype)

    # min_core + ||z||^2 is exactly ||z_n - e_{idx_n}||^2 (summed over D).
    # Reduce it to one per-tile partial sum (clamped against tiny negatives
    # from cancellation) and store it in lane 0 of the loss tile.
    z_sq = jnp.sum(z * z, axis=0, keepdims=True)                  # (1, tn)
    tile_sum = jnp.sum(jnp.maximum(min_core + z_sq, 0.0))         # scalar
    lane = jax.lax.broadcasted_iota(jnp.int32, (1, 128), 1)
    mind_ref[0] = jnp.where(lane == 0, tile_sum, jnp.float32(0.0))


def _pick_spatial_tile(hw, k, d, z_itemsize, cap=512, budget_bytes=24 << 20):
    """Largest multiple-of-128 divisor of hw (<= cap) whose VMEM use fits."""
    if hw % 128 != 0:
        # TODO(synk): pad HW to a multiple of 128 (masking pad positions out of
        # the loss) instead of one lane-masked full-extent block for large HW.
        return hw

    def need(tn):
        return (4 * d * tn * z_itemsize          # z in + z_q out, double-buffered
                + 2 * tn * 4 + 2 * 128 * 4       # idx / loss tiles
                + k * (d + 1) * 4 + d * k * 4    # resident codebook copies
                + (d + 1) * tn * 4               # z_aug scratch
                + 6 * k * tn * 4)                # (K, tn) f32 intermediates

    for cand in range(min(cap, hw), 127, -128):
        if hw % cand == 0 and need(cand) <= budget_bytes:
            return cand
    return 128


@functools.partial(jax.jit, static_argnames=("commitment_cost",))
def vector_quantizer_forward(z, embedding, commitment_cost=0.25):
    """Pallas forward pass of VectorQuantizer.

    Args:
      z:          [B, D, H, W] (NCHW, as in PyTorch)
      embedding:  [K, D] codebook
    Returns:
      (z_q [B, D, H, W], loss scalar, encoding_indices [B*H*W] int32)
    """
    B, D, H, W = z.shape
    K, D2 = embedding.shape
    assert D2 == D, "embedding dim mismatch"
    assert H == W, "height must equal width"
    HW = H * W

    # Consume z as [B, D, H*W]: a free reshape of NCHW, no transpose anywhere.
    z3 = z.reshape(B, D, HW)

    emb_f32 = embedding.astype(jnp.float32)
    e_sq = jnp.sum(emb_f32 * emb_f32, axis=1, keepdims=True)      # (K, 1)
    e_aug = jnp.concatenate([-2.0 * emb_f32, e_sq], axis=1)       # (K, D+1)
    e_t = emb_f32.T                                               # (D, K)

    tn = _pick_spatial_tile(HW, K, D, z3.dtype.itemsize)
    n_j = HW // tn
    # v7x megacore: guarantee >= 2 shardable grid steps when possible.
    if B * n_j < 2 and HW % 256 == 0:
        tn, n_j = HW // 2, 2

    vmem_need = (4 * D * tn * z3.dtype.itemsize
                 + 2 * tn * 4 + 2 * 128 * 4
                 + K * (D + 1) * 4 + D * K * 4
                 + (D + 1) * tn * 4
                 + 6 * K * tn * 4)
    vmem_limit = int(min(max(vmem_need * 3 // 2, 32 << 20), 64 << 20))

    # TODO(synk): for very large codebooks (K*D*4 approaching the VMEM budget,
    # esp. v7x's 64 MiB) block the codebook along K with an extra "arbitrary"
    # grid axis carrying a running (min, argmin) in VMEM scratch.
    zq3, idx3, mind = pl.pallas_call(
        _vq_kernel,
        out_shape=(
            jax.ShapeDtypeStruct((B, D, HW), z.dtype),
            jax.ShapeDtypeStruct((B, 1, HW), jnp.int32),
            jax.ShapeDtypeStruct((B, 1, n_j * 128), jnp.float32),
        ),
        grid_spec=pltpu.PrefetchScalarGridSpec(
            num_scalar_prefetch=0,
            grid=(B, n_j),
            in_specs=[
                pl.BlockSpec((1, D, tn), lambda b, j: (b, 0, j)),   # z tile
                pl.BlockSpec((K, D + 1), lambda b, j: (0, 0),       # [-2e | e^2]
                             pipeline_mode=pl.Buffered(1)),
                pl.BlockSpec((D, K), lambda b, j: (0, 0),           # codebook^T
                             pipeline_mode=pl.Buffered(1)),
            ],
            out_specs=[
                pl.BlockSpec((1, D, tn), lambda b, j: (b, 0, j)),   # z_q tile
                pl.BlockSpec((1, 1, tn), lambda b, j: (b, 0, j)),   # indices
                pl.BlockSpec((1, 1, 128), lambda b, j: (b, 0, j)),  # loss partials
            ],
            scratch_shapes=[pltpu.VMEM((D + 1, tn), jnp.float32)],
        ),
        compiler_params=pltpu.CompilerParams(
            # No resident/accumulating outputs -> both grid axes fully parallel
            # (lets v7x's two TensorCores split the work).
            dimension_semantics=("parallel", "parallel"),
            vmem_limit_bytes=vmem_limit,
        ),
    )(z3, e_aug, e_t)

    z_q = zq3.reshape(B, D, H, W)                 # already NCHW, no transpose
    mse = jnp.sum(mind) / jnp.float32(B * D * HW)
    # Forward value: q_latent_loss == e_latent_loss == mse.
    loss = (1.0 + commitment_cost) * mse
    # TODO(synk): straight-through estimator (z + (z_q - z).detach()) and the
    # separate q/e latent losses differ only in gradients; a custom_vjp is
    # needed if this forward is ever differentiated for training.
    encoding_indices = idx3.reshape(-1)           # (B*H*W,), torch flatten order
    return z_q, loss, encoding_indices


if __name__ == "__main__":
    # Module config (small, consistent with VQ-VAE on CIFAR-style features).
    num_embeddings = 32    # K
    embedding_dim = 4      # D
    commitment_cost = 0.25
    B, H, W = 2, 16, 16    # H*W = 256

    key = jax.random.PRNGKey(0)
    k_z, k_e = jax.random.split(key)

    # Deterministic parameter init: uniform(-1/K, 1/K), like the PyTorch __init__.
    embedding = jax.random.uniform(
        k_e, (num_embeddings, embedding_dim), jnp.float32,
        minval=-1.0 / num_embeddings, maxval=1.0 / num_embeddings)

    z = jax.random.normal(k_z, (B, embedding_dim, H, W), jnp.float32)

    z_q, loss, idx = vector_quantizer_forward(
        z, embedding, commitment_cost=commitment_cost)
    jax.block_until_ready((z_q, loss, idx))

    # Light correctness check against a plain-JAX reference (PyTorch formula).
    z_flat = jnp.transpose(z, (0, 2, 3, 1)).reshape(-1, embedding_dim)
    d_ref = (jnp.sum(z_flat**2, 1, keepdims=True)
             + jnp.sum(embedding**2, 1)[None, :]
             - 2.0 * z_flat @ embedding.T)
    idx_ref = jnp.argmin(d_ref, axis=1)
    zq_ref = jnp.transpose(embedding[idx_ref].reshape(B, H, W, embedding_dim),
                           (0, 3, 1, 2))
    mse_ref = jnp.mean((zq_ref - z) ** 2)
    loss_ref = mse_ref * (1.0 + commitment_cost)

    assert jnp.array_equal(idx, idx_ref.astype(jnp.int32))
    assert jnp.allclose(z_q, zq_ref, atol=1e-5, rtol=1e-5)
    assert jnp.allclose(loss, loss_ref, atol=1e-5, rtol=1e-5)

    print("KERNEL_OK")
</pallas_src>

<mosaic_0001>
module attributes {stable_mosaic.version = 11 : i64} {
  func.func @_vq_kernel(%arg0: i32, %arg1: i32, %arg2: memref<1x4x256xf32, #tpu.memory_space<vmem>>, %arg3: memref<32x5xf32, #tpu.memory_space<vmem>>, %arg4: memref<4x32xf32, #tpu.memory_space<vmem>>, %arg5: memref<1x4x256xf32, #tpu.memory_space<vmem>>, %arg6: memref<1x1x256xi32, #tpu.memory_space<vmem>>, %arg7: memref<1x1x128xf32, #tpu.memory_space<vmem>>, %arg8: memref<5x256xf32, #tpu.memory_space<vmem>>) attributes {dimension_semantics = [#tpu.dimension_semantics<parallel>, #tpu.dimension_semantics<parallel>], iteration_bounds = array<i64: 2, 1>, scalar_prefetch = 0 : i64, scratch_operands = 1 : i64, tpu.core_type = #tpu.core_type<tc>, window_params = [{transform_indices = @transform_0, window_bounds = array<i64: 1, 4, 256>}, {pipeline_mode = #tpu.pipeline_mode<synchronous>, transform_indices = @transform_1, window_bounds = array<i64: 32, 5>}, {pipeline_mode = #tpu.pipeline_mode<synchronous>, transform_indices = @transform_2, window_bounds = array<i64: 4, 32>}, {transform_indices = @transform_3, window_bounds = array<i64: 1, 4, 256>}, {transform_indices = @transform_4, window_bounds = array<i64: 1, 1, 256>}, {transform_indices = @transform_5, window_bounds = array<i64: 1, 1, 128>}]} {
    %c0 = arith.constant 0 : index
    %c0_0 = arith.constant 0 : index
    %c0_1 = arith.constant 0 : index
    %0 = vector.load %arg2[%c0, %c0_0, %c0_1] : memref<1x4x256xf32, #tpu.memory_space<vmem>>, vector<1x4x256xf32>
    %1 = vector.shape_cast %0 : vector<1x4x256xf32> to vector<4x256xf32>
    %c0_2 = arith.constant 0 : index
    %c0_3 = arith.constant 0 : index
    %2 = vector.load %arg8[%c0_2, %c0_3] : memref<5x256xf32, #tpu.memory_space<vmem>>, vector<4x256xf32>
    tpu.vector_store %arg8[%c0_2, %c0_3], %1 {strides = array<i32>} : memref<5x256xf32, #tpu.memory_space<vmem>>, vector<4x256xf32>,
    %cst = arith.constant 1.000000e+00 : f32
    %3 = vector.broadcast %cst : f32 to vector<1x256xf32>
    %c4 = arith.constant 4 : index
    %c0_4 = arith.constant 0 : index
    %4 = vector.load %arg8[%c4, %c0_4] : memref<5x256xf32, #tpu.memory_space<vmem>>, vector<1x256xf32>
    tpu.vector_store %arg8[%c4, %c0_4], %3 {strides = array<i32>} : memref<5x256xf32, #tpu.memory_space<vmem>>, vector<1x256xf32>,
    %c0_5 = arith.constant 0 : index
    %c0_6 = arith.constant 0 : index
    %5 = vector.load %arg8[%c0_5, %c0_6] : memref<5x256xf32, #tpu.memory_space<vmem>>, vector<5x256xf32>
    %c0_7 = arith.constant 0 : index
    %c0_8 = arith.constant 0 : index
    %6 = vector.load %arg3[%c0_7, %c0_8] : memref<32x5xf32, #tpu.memory_space<vmem>>, vector<32x5xf32>
    %cst_9 = arith.constant dense<0.000000e+00> : vector<32x256xf32>
    %7 = tpu.matmul %6, %5, %cst_9 {dimension_numbers = #tpu.dot_dimension_numbers<[1], [0], [0], [1], [0, 0, 1, 1], [], []>} : vector<32x5xf32>, vector<5x256xf32>, vector<32x256xf32> -> vector<32x256xf32>
    %cst_10 = arith.constant dense<0x7F800000> : vector<256xf32>
    %8 = vector.multi_reduction <minimumf>, %7, %cst_10 [0] : vector<32x256xf32> to vector<256xf32>
    %9 = vector.shape_cast %8 : vector<256xf32> to vector<1x256xf32>
    %10 = tpu.iota {dimensions = array<i32: 0>} : vector<32x256xi32>
    %11 = vector.broadcast %9 : vector<1x256xf32> to vector<32x256xf32>
    %12 = arith.cmpf oeq, %7, %11 : vector<32x256xf32>
    %c32_i32 = arith.constant 32 : i32
    %13 = vector.broadcast %c32_i32 : i32 to vector<32x256xi32>
    %14 = arith.select %12, %10, %13 : vector<32x256xi1>, vector<32x256xi32>
    %cst_11 = arith.constant dense<2147483647> : vector<256xi32>
    %15 = vector.multi_reduction <minsi>, %14, %cst_11 [0] : vector<32x256xi32> to vector<256xi32>
    %16 = vector.shape_cast %15 : vector<256xi32> to vector<1x256xi32>
    %c0_12 = arith.constant 0 : index
    %c0_13 = arith.constant 0 : index
    %c0_14 = arith.constant 0 : index
    %17 = vector.load %arg6[%c0_12, %c0_13, %c0_14] : memref<1x1x256xi32, #tpu.memory_space<vmem>>, vector<1x1x256xi32>
    %18 = vector.shape_cast %17 : vector<1x1x256xi32> to vector<1x256xi32>
    %19 = vector.shape_cast %16 : vector<1x256xi32> to vector<1x1x256xi32>
    tpu.vector_store %arg6[%c0_12, %c0_13, %c0_14], %19 {strides = array<i32>} : memref<1x1x256xi32, #tpu.memory_space<vmem>>, vector<1x1x256xi32>,
    %20 = vector.broadcast %16 : vector<1x256xi32> to vector<32x256xi32>
    %21 = arith.cmpi eq, %14, %20 : vector<32x256xi32>
    %22 = arith.extui %21 : vector<32x256xi1> to vector<32x256xi32>
    %23 = arith.sitofp %22 : vector<32x256xi32> to vector<32x256xf32>
    %c0_15 = arith.constant 0 : index
    %c0_16 = arith.constant 0 : index
    %24 = vector.load %arg4[%c0_15, %c0_16] : memref<4x32xf32, #tpu.memory_space<vmem>>, vector<4x32xf32>
    %cst_17 = arith.constant dense<0.000000e+00> : vector<4x256xf32>
    %25 = tpu.matmul %24, %23, %cst_17 {dimension_numbers = #tpu.dot_dimension_numbers<[1], [0], [0], [1], [0, 0, 1, 1], [], []>} : vector<4x32xf32>, vector<32x256xf32>, vector<4x256xf32> -> vector<4x256xf32>
    %c0_18 = arith.constant 0 : index
    %c0_19 = arith.constant 0 : index
    %c0_20 = arith.constant 0 : index
    %26 = vector.load %arg5[%c0_18, %c0_19, %c0_20] : memref<1x4x256xf32, #tpu.memory_space<vmem>>, vector<1x4x256xf32>
    %27 = vector.shape_cast %26 : vector<1x4x256xf32> to vector<4x256xf32>
    %28 = vector.shape_cast %25 : vector<4x256xf32> to vector<1x4x256xf32>
    tpu.vector_store %arg5[%c0_18, %c0_19, %c0_20], %28 {strides = array<i32>} : memref<1x4x256xf32, #tpu.memory_space<vmem>>, vector<1x4x256xf32>,
    %29 = arith.mulf %1, %1 : vector<4x256xf32>
    %cst_21 = arith.constant dense<0.000000e+00> : vector<256xf32>
    %30 = vector.multi_reduction <add>, %29, %cst_21 [0] : vector<4x256xf32> to vector<256xf32>
    %31 = vector.shape_cast %30 : vector<256xf32> to vector<1x256xf32>
    %32 = arith.addf %9, %31 : vector<1x256xf32>
    %cst_22 = arith.constant 0.000000e+00 : f32
    %33 = vector.broadcast %cst_22 : f32 to vector<1x256xf32>
    %34 = arith.maximumf %32, %33 : vector<1x256xf32>
    %35 = vector.shape_cast %34 : vector<1x256xf32> to vector<1x1x256xf32>
    %cst_23 = arith.constant dense<0.000000e+00> : vector<1xf32>
    %36 = vector.multi_reduction <add>, %35, %cst_23 [1, 2] : vector<1x1x256xf32> to vector<1xf32>
    %37 = vector.shape_cast %36 : vector<1xf32> to vector<1x1x1xf32>
    %38 = vector.extract %37[0, 0, 0] : f32 from vector<1x1x1xf32>
    %39 = tpu.iota {dimensions = array<i32: 1>} : vector<1x128xi32>
    %c0_i32 = arith.constant 0 : i32
    %40 = vector.broadcast %c0_i32 : i32 to vector<1x128xi32>
    %41 = arith.cmpi eq, %39, %40 : vector<1x128xi32>
    %cst_24 = arith.constant 0.000000e+00 : f32
    %42 = vector.broadcast %38 : f32 to vector<1x128xf32>
    %43 = vector.broadcast %cst_24 : f32 to vector<1x128xf32>
    %44 = arith.select %41, %42, %43 : vector<1x128xi1>, vector<1x128xf32>
    %c0_25 = arith.constant 0 : index
    %c0_26 = arith.constant 0 : index
    %c0_27 = arith.constant 0 : index
    %45 = vector.load %arg7[%c0_25, %c0_26, %c0_27] : memref<1x1x128xf32, #tpu.memory_space<vmem>>, vector<1x1x128xf32>
    %46 = vector.shape_cast %45 : vector<1x1x128xf32> to vector<1x128xf32>
    %47 = vector.shape_cast %44 : vector<1x128xf32> to vector<1x1x128xf32>
    tpu.vector_store %arg7[%c0_25, %c0_26, %c0_27], %47 {strides = array<i32>} : memref<1x1x128xf32, #tpu.memory_space<vmem>>, vector<1x1x128xf32>,
    return
  }
  func.func @transform_0(%arg0: i32, %arg1: i32) -> (i32, i32, i32) {
    %c0_i32 = arith.constant 0 : i32
    %c0_i32_0 = arith.constant 0 : i32
    return %arg0, %c0_i32, %arg1 : i32, i32, i32
  }
  func.func @transform_1(%arg0: i32, %arg1: i32) -> (i32, i32) {
    %c0_i32 = arith.constant 0 : i32
    %c0_i32_0 = arith.constant 0 : i32
    %c0_i32_1 = arith.constant 0 : i32
    return %c0_i32, %c0_i32_0 : i32, i32
  }
  func.func @transform_2(%arg0: i32, %arg1: i32) -> (i32, i32) {
    %c0_i32 = arith.constant 0 : i32
    %c0_i32_0 = arith.constant 0 : i32
    %c0_i32_1 = arith.constant 0 : i32
    return %c0_i32, %c0_i32_0 : i32, i32
  }
  func.func @transform_3(%arg0: i32, %arg1: i32) -> (i32, i32, i32) {
    %c0_i32 = arith.constant 0 : i32
    %c0_i32_0 = arith.constant 0 : i32
    return %arg0, %c0_i32, %arg1 : i32, i32, i32
  }
  func.func @transform_4(%arg0: i32, %arg1: i32) -> (i32, i32, i32) {
    %c0_i32 = arith.constant 0 : i32
    %c0_i32_0 = arith.constant 0 : i32
    return %arg0, %c0_i32, %arg1 : i32, i32, i32
  }
  func.func @transform_5(%arg0: i32, %arg1: i32) -> (i32, i32, i32) {
    %c0_i32 = arith.constant 0 : i32
    %c0_i32_0 = arith.constant 0 : i32
    return %arg0, %c0_i32, %arg1 : i32, i32, i32
  }
}

</mosaic_0001>

<llo_original>
// kernel: vector_quantizer_forward.1
$region0: #{vector_quantizer_forward.1}
  #allocation0 [shape = 'u32[]', space=smem, size = 0x4, offset = 0x4, fixed_abs, tag = 'smem constant byte address 0x4 - core index']
  #allocation1 [shape = 'u32[144,128]{1,0:T(1,128)}', space=vmem, size = 0x12000, scoped, tag = 'internal scratch']
  #allocation2 [shape = 'f32[5,256]{1,0:T(8,128)}', space=vmem, size = 0x2000, scoped, tag = 'scratch operand']
  %s0 = inlined_call_operand.vmem [shape: f32[2,4,256], index: 0, kind: input, shape index: {}]
  %s1 = inlined_call_operand.vmem [shape: f32[32,5], index: 1, kind: input, shape index: {}]
  %s2 = inlined_call_operand.vmem [shape: f32[4,32], index: 2, kind: input, shape index: {}]
  %s3 = inlined_call_operand.vmem [shape: f32[2,4,256], index: 3, kind: output, shape index: {0}]
  %s4 = inlined_call_operand.hbm [shape: s32[2,1,256], index: 4, kind: output, shape index: {1}]
  %s5 = inlined_call_operand.vmem [shape: f32[2,1,128], index: 5, kind: output, shape index: {2}]
  %6 = xla_tuple %s3, %s4, %s5
  %s7 = sld [smem:[#allocation0]]
  $region61: #{vector_quantizer_forward.1} parent=0
    _
  %s9 = ssub.s32 1, %s7
  %s10 = scalar_select 0, %s9, %s7
  $region1: #{vector_quantizer_forward.1} parent=0
    #allocation3 [shape = 'u8[2048]{0}', space=vmem, size = 0x800, scoped, tag = 'output window, operand 1']
    #allocation4 [shape = 's32[2]{0}', space=sflag, size = 0x8, scoped, tag = 'scoped memory for vector_quantizer_forward.1']
    %11 = vsyncpa [#allocation4], 0
    %s12 = scalar_lea.sflag [#allocation4], 1
    %13 = vsyncpa %s12, 0
    loop: start=0, step=1, limit=4
    $region2: #{vector_quantizer_forward.1} parent=1 // loop_pre_header
      _
    $region3: #{vector_quantizer_forward.1} parent=1 // loop_header
      %s15 = sphi 0, %s19
      %p16 = scmp.ge.s32.totalorder %s15, 4
      %s22 = sphi 0, %s34
      %s23 = sphi 0, %s30
      %s24 = sphi 0, %s22
      %s25 = sphi 0, %s23
      %s26 = sphi 0, %s24
      %s27 = sphi 0, %s25
      %s39 = sphi 0, %s41
      %s42 = sphi 0, %s39
      %s43 = sphi 0, %s42
      %s59 = sphi 0, %s43
      %s63 = sphi 0, %s63
      %s65 = sphi 0, %s63
      %s66 = sphi 0, %s65
      %s80 = sphi 0, %s66
      %s84 = sphi 0, %s84
      %s86 = sphi 0, %s84
      %s87 = sphi 0, %s86
      %s101 = sphi 0, %s87
      %s109 = sphi 0, %s111
      %s112 = sphi 0, %s109
      %s113 = sphi 0, %s112
      %s129 = sphi 0, %s113
      %s137 = sphi 0, %s139
      %s140 = sphi 0, %s137
      %s141 = sphi 0, %s140
      %s157 = sphi 0, %s141
      %s165 = sphi 0, %s167
      %s168 = sphi 0, %s165
      %s169 = sphi 0, %s168
      %s185 = sphi 0, %s169
    $region4: #{vector_quantizer_forward.1} parent=1 // loop_header_branch
      %18 = sbr.rel (%p16) target = $region8
    $region5: #{vector_quantizer_forward.1} parent=1 // loop_body
      %s20 = ssub.s32 %s15, 1
      %s21 = ssub.s32 %s15, 2
      %s28 = sadd.s32 1, %s23
      %p29 = scmp.ge.s32.totalorder %s28, 1
      %s30 = scalar_select %p29, 0, %s28
      %s31 = sadd.s32 1, %s22
      %s32 = scalar_select %p29, %s31, %s22
      %p33 = scmp.ge.s32.totalorder %s32, 2
      %s34 = scalar_select %p33, 0, %s32
      %s35 = ssub.s32 %s22, %s34
      %s36 = ssub.s32 %s23, %s30
      %s37 = sor.u32 %s35, %s36
      %p38 = scmp.eq.s32.totalorder %s37, 0
      %s40 = sadd.s32 %s39, 1
      %s41 = scalar_select %p38, %s39, %s40
      %p44 = pneg %p38
      %p45 = scmp.eq.s32.totalorder %s15, 1
      %p46 = por %p44, %p45
      %p47 = scmp.ne.s32.totalorder %s39, %s42
      %p48 = scmp.eq.s32.totalorder %s15, 0
      %p49 = por %p47, %p48
      %p50 = scmp.ne.s32.totalorder %s39, %s42
      %p51 = scmp.eq.s32.totalorder %s20, 1
      %p52 = por %p50, %p51
      %p53 = scmp.ne.s32.totalorder %s42, %s43
      %p54 = scmp.eq.s32.totalorder %s20, 0
      %p55 = por %p53, %p54
      %p56 = scmp.ne.s32.totalorder %s42, %s43
      %p57 = scmp.eq.s32.totalorder %s21, 1
      %p58 = por %p56, %p57
      %p60 = scmp.ne.s32.totalorder %s43, %s59
      %p61 = scmp.eq.s32.totalorder %s21, 0
      %p62 = por %p60, %p61
      %s64 = sadd.s32 %s63, 1
      %p67 = scmp.eq.s32.totalorder %s15, 1
      %p68 = scmp.ne.s32.totalorder %s63, %s65
      %p69 = scmp.eq.s32.totalorder %s15, 0
      %p70 = por %p68, %p69
      %p71 = scmp.ne.s32.totalorder %s63, %s65
      %p72 = scmp.eq.s32.totalorder %s20, 1
      %p73 = por %p71, %p72
      %p74 = scmp.ne.s32.totalorder %s65, %s66
      %p75 = scmp.eq.s32.totalorder %s20, 0
      %p76 = por %p74, %p75
      %p77 = scmp.ne.s32.totalorder %s65, %s66
      %p78 = scmp.eq.s32.totalorder %s21, 1
      %p79 = por %p77, %p78
      %p81 = scmp.ne.s32.totalorder %s66, %s80
      %p82 = scmp.eq.s32.totalorder %s21, 0
      %p83 = por %p81, %p82
      %s85 = sadd.s32 %s84, 1
      %p88 = scmp.eq.s32.totalorder %s15, 1
      %p89 = scmp.ne.s32.totalorder %s84, %s86
      %p90 = scmp.eq.s32.totalorder %s15, 0
      %p91 = por %p89, %p90
      %p92 = scmp.ne.s32.totalorder %s84, %s86
      %p93 = scmp.eq.s32.totalorder %s20, 1
      %p94 = por %p92, %p93
      %p95 = scmp.ne.s32.totalorder %s86, %s87
      %p96 = scmp.eq.s32.totalorder %s20, 0
      %p97 = por %p95, %p96
      %p98 = scmp.ne.s32.totalorder %s86, %s87
      %p99 = scmp.eq.s32.totalorder %s21, 1
      %p100 = por %p98, %p99
      %p102 = scmp.ne.s32.totalorder %s87, %s101
      %p103 = scmp.eq.s32.totalorder %s21, 0
      %p104 = por %p102, %p103
      %s105 = ssub.s32 %s22, %s34
      %s106 = ssub.s32 %s23, %s30
      %s107 = sor.u32 %s105, %s106
      %p108 = scmp.eq.s32.totalorder %s107, 0
      %s110 = sadd.s32 %s109, 1
      %s111 = scalar_select %p108, %s109, %s110
      %p114 = pneg %p108
      %p115 = scmp.eq.s32.totalorder %s15, 1
      %p116 = por %p114, %p115
      %p117 = scmp.ne.s32.totalorder %s109, %s112
      %p118 = scmp.eq.s32.totalorder %s15, 0
      %p119 = por %p117, %p118
      %p120 = scmp.ne.s32.totalorder %s109, %s112
      %p121 = scmp.eq.s32.totalorder %s20, 1
      %p122 = por %p120, %p121
      %p123 = scmp.ne.s32.totalorder %s112, %s113
      %p124 = scmp.eq.s32.totalorder %s20, 0
      %p125 = por %p123, %p124
      %p126 = scmp.ne.s32.totalorder %s112, %s113
      %p127 = scmp.eq.s32.totalorder %s21, 1
      %p128 = por %p126, %p127
      %p130 = scmp.ne.s32.totalorder %s113, %s129
      %p131 = scmp.eq.s32.totalorder %s21, 0
      %p132 = por %p130, %p131
      %s133 = ssub.s32 %s22, %s34
      %s134 = ssub.s32 %s23, %s30
      %s135 = sor.u32 %s133, %s134
      %p136 = scmp.eq.s32.totalorder %s135, 0
      %s138 = sadd.s32 %s137, 1
      %s139 = scalar_select %p136, %s137, %s138
      %p142 = pneg %p136
      %p143 = scmp.eq.s32.totalorder %s15, 1
      %p144 = por %p142, %p143
      %p145 = scmp.ne.s32.totalorder %s137, %s140
      %p146 = scmp.eq.s32.totalorder %s15, 0
      %p147 = por %p145, %p146
      %p148 = scmp.ne.s32.totalorder %s137, %s140
      %p149 = scmp.eq.s32.totalorder %s20, 1
      %p150 = por %p148, %p149
      %p151 = scmp.ne.s32.totalorder %s140, %s141
      %p152 = scmp.eq.s32.totalorder %s20, 0
      %p153 = por %p151, %p152
      %p154 = scmp.ne.s32.totalorder %s140, %s141
      %p155 = scmp.eq.s32.totalorder %s21, 1
      %p156 = por %p154, %p155
      %p158 = scmp.ne.s32.totalorder %s141, %s157
      %p159 = scmp.eq.s32.totalorder %s21, 0
      %p160 = por %p158, %p159
      %s161 = ssub.s32 %s22, %s34
      %s162 = ssub.s32 %s23, %s30
      %s163 = sor.u32 %s161, %s162
      %p164 = scmp.eq.s32.totalorder %s163, 0
      %s166 = sadd.s32 %s165, 1
      %s167 = scalar_select %p164, %s165, %s166
      %p170 = pneg %p164
      %p171 = scmp.eq.s32.totalorder %s15, 1
      %p172 = por %p170, %p171
      %p173 = scmp.ne.s32.totalorder %s165, %s168
      %p174 = scmp.eq.s32.totalorder %s15, 0
      %p175 = por %p173, %p174
      %p176 = scmp.ne.s32.totalorder %s165, %s168
      %p177 = scmp.eq.s32.totalorder %s20, 1
      %p178 = por %p176, %p177
      %p179 = scmp.ne.s32.totalorder %s168, %s169
      %p180 = scmp.eq.s32.totalorder %s20, 0
      %p181 = por %p179, %p180
      %p182 = scmp.ne.s32.totalorder %s168, %s169
      %p183 = scmp.eq.s32.totalorder %s21, 1
      %p184 = por %p182, %p183
      %p186 = scmp.ne.s32.totalorder %s169, %s185
      %p187 = scmp.eq.s32.totalorder %s21, 0
      %p188 = por %p186, %p187
      %p189 = scmp.le.s32.totalorder 1, %s15
      %p190 = scmp.lt.s32.totalorder %s15, 3
      %p191 = pnand %p189, %p190
      %p192 = pneg %p191
      // Predicated region
      $region9: #{vector_quantizer_forward.1} parent=5 // pred_check
        _
      $region10: #{vector_quantizer_forward.1} parent=5 // pred_check_branch
        %194 = sbr.rel (%p191) target = $region12
      $region11: #{vector_quantizer_forward.1} parent=5 // pred_region
        %s195 = ssub.s32 %s15, 1
        // Predicated region
        $region13: #{vector_quantizer_forward.1} parent=11 // pred_check
          %p196 = pneg %p76
        $region14: #{vector_quantizer_forward.1} parent=11 // pred_check_branch
          %198 = sbr.rel (%p196) target = $region16
        $region15: #{vector_quantizer_forward.1} parent=11 // pred_region
          _
        $region16: #{vector_quantizer_forward.1} parent=11 // pred_fallthru
          _
        // Predicated region
        $region17: #{vector_quantizer_forward.1} parent=11 // pred_check
          %p199 = pneg %p97
        $region18: #{vector_quantizer_forward.1} parent=11 // pred_check_branch
          %201 = sbr.rel (%p199) target = $region20
        $region19: #{vector_quantizer_forward.1} parent=11 // pred_region
          _
        $region20: #{vector_quantizer_forward.1} parent=11 // pred_fallthru
          _
      $region12: #{vector_quantizer_forward.1} parent=5 // pred_fallthru
        _
      %p202 = scmp.lt.s32.totalorder %s15, 2
      // Predicated region
      $region21: #{vector_quantizer_forward.1} parent=5 // pred_check
        %p203 = pneg %p202
      $region22: #{vector_quantizer_forward.1} parent=5 // pred_check_branch
        %205 = sbr.rel (%p203) target = $region24
      $region23: #{vector_quantizer_forward.1} parent=5 // pred_region
        // Predicated region
        $region25: #{vector_quantizer_forward.1} parent=23 // pred_check
          %p206 = pneg %p49
        $region26: #{vector_quantizer_forward.1} parent=23 // pred_check_branch
          %208 = sbr.rel (%p206) target = $region28
        $region27: #{vector_quantizer_forward.1} parent=23 // pred_region
          %s209 = smul.u32 2, %s23
          %p210 = scmp.lt.s32.totalorder %s22, 1
          %s211 = scalar_select %p210, %s22, 1
          %p212 = scmp.lt.s32.totalorder %s209, 1
          %s213 = scalar_select %p212, %s209, 1
          %s214 = smul.addr %s211, 2
          %s215 = sadd.s32 %s213, %s214
          %s216 = smul.addr %s215, 4
          %s217 = scalar_lea.vmem %s0, %s216
          %s218 = smul.u32 2, %s23
        $region28: #{vector_quantizer_forward.1} parent=23 // pred_fallthru
          _
      $region24: #{vector_quantizer_forward.1} parent=5 // pred_fallthru
        _
      %p219 = scmp.le.s32.totalorder 1, %s15
      %p220 = scmp.lt.s32.totalorder %s15, 3
      %p221 = pnand %p219, %p220
      %p222 = pneg %p221
      // Predicated region
      $region29: #{vector_quantizer_forward.1} parent=5 // pred_check
        _
      $region30: #{vector_quantizer_forward.1} parent=5 // pred_check_branch
        %224 = sbr.rel (%p221) target = $region32
      $region31: #{vector_quantizer_forward.1} parent=5 // pred_region
        %s225 = ssub.s32 %s15, 1
        %s226 = smul.u32 2, %s25
        %p227 = scmp.lt.s32.totalorder %s24, 1
        %s228 = scalar_select %p227, %s24, 1
        %p229 = scmp.lt.s32.totalorder %s226, 1
        %s230 = scalar_select %p229, %s226, 1
        %s231 = smul.addr %s228, 2
        %s232 = sadd.s32 %s230, %s231
        %s233 = smul.addr %s232, 4
        %s234 = scalar_lea.vmem %s0, %s233
        %p235 = pneg %p55
        %p236 = pneg %p52
        %p237 = pneg %p76
        %p238 = pneg %p73
        %p239 = pneg %p97
        %p240 = pneg %p94
        %p241 = pneg %p125
        %p242 = pneg %p122
        %s243 = smul.u32 2, %s25
        %p244 = scmp.lt.s32.totalorder %s24, 1
        %s245 = scalar_select %p244, %s24, 1
        %p246 = scmp.lt.s32.totalorder %s243, 1
        %s247 = scalar_select %p246, %s243, 1
        %s248 = smul.addr %s245, 2
        %s249 = sadd.s32 %s247, %s248
        %s250 = smul.addr %s249, 4
        %s251 = scalar_lea.vmem %s3, %s250
        %p252 = pneg %p153
        %p253 = pneg %p150
        %s254 = sand.u32 %s140, 1
        %s255 = scalar_lea.sflag [#allocation4], %s254
        %s256 = sand.u32 %s140, 1
        %s257 = smul.addr %s256, 2
        %s258 = scalar_lea.vmem [#allocation3], %s257
        %p259 = pneg %p181
        %p260 = pneg %p178
        %p261 = scmp.lt.s32.totalorder %s24, 1
        %s262 = scalar_select %p261, %s24, 1
        %p263 = scmp.lt.s32.totalorder %s25, 0
        %s264 = scalar_select %p263, %s25, 0
        %s265 = sadd.s32 %s264, %s262
        %s266 = scalar_lea.vmem %s5, %s265
        %s267 = smul.u32 2, %s25
        %p268 = scmp.lt.s32.totalorder %s24, 1
        %s269 = scalar_select %p268, %s24, 1
        %p270 = scmp.lt.s32.totalorder %s267, 1
        %s271 = scalar_select %p270, %s267, 1
        %s272 = smul.addr %s269, 2
        %s273 = sadd.s32 %s271, %s272
        %s274 = smul.addr %s273, 4
        %s275 = scalar_lea.vmem %s0, %s274
        %s276 = smul.u32 2, %s25
        %s277 = smul.u32 2, %s25
        %p278 = scmp.lt.s32.totalorder %s24, 1
        %s279 = scalar_select %p278, %s24, 1
        %p280 = scmp.lt.s32.totalorder %s277, 1
        %s281 = scalar_select %p280, %s277, 1
        %s282 = smul.addr %s279, 2
        %s283 = sadd.s32 %s281, %s282
        %s284 = smul.addr %s283, 4
        %s285 = scalar_lea.vmem %s3, %s284
        %s286 = smul.u32 2, %s25
        %s287 = smul.u32 2, %s25
        %p288 = scmp.lt.s32.totalorder %s24, 1
        %s289 = scalar_select %p288, %s24, 1
        %p290 = scmp.lt.s32.totalorder %s25, 0
        %s291 = scalar_select %p290, %s25, 0
        %s292 = sadd.s32 %s291, %s289
        %s293 = scalar_lea.vmem %s5, %s292
        %v294 = vld [vmem:[%s275] sm:$0xff]
        %v296 = vcombine.high %v294, %v294
        %298 = vst [vmem:[#allocation2] sm:$0xf] %v294
        %299 = vst [vmem:[#allocation2 + $0x8] sm:$0xf] %v296
        %v300 = vlaneseq
        %vm301 = vcmp.ge.s32.totalorder %v300, 0
        %vm302 = vcmp.lt.s32.totalorder %v300, 256
        %vm303 = vmand %vm301, %vm302
        %s304 = scalar_lea.vmem [#allocation2], 4
        %305 = vst.msk [vmem:[%s304] ss:$8 sm:$0x3] %vm303, 1.0
        %306 = vst.msk [vmem:[%s304] ss:$8 sm:$0x0] %vm303, 1.0
        %v307 = vld [vmem:[#allocation2] sm:$0x1f]
        %v308 = vld [vmem:[#allocation2 + $0x8] sm:$0x1f]
        %v309 = vld [vmem:[%s1] sm:$0xff]
        %v310 = vld [vmem:[%s1 + $0x8] sm:$0xff]
        %v311 = vld [vmem:[%s1 + $0x10] sm:$0xff]
        %v312 = vld [vmem:[%s1 + $0x18] sm:$0xff]
        %vm313 = vcmask 39936
        %v315 = vsel %vm313, %v309, 0
        %v318 = vsel %vm313, %v310, 0
        %v321 = vsel %vm313, %v311, 0
        %v324 = vsel %vm313, %v312, 0
        %vm326 = vcmask 1044480
        %v328 = vsel %vm326, %v307, 0
        %v331 = vsel %vm326, %v308, 0
        %333 = vmatprep.subr.mxu0 0.0
        %334 = vmatpush1.msra.mxu0 0.0
        %335 = vmatprep.subr.mxu0 0.0
        %336 = vmatpush1.msra.mxu0 0.0
        %337 = vmatprep.subr.mxu0 0.0
        %338 = vmatpush1.msra.mxu0 0.0
        %339 = vmatprep.subr.mxu0 0.0
        %340 = vmatpush1.msra.mxu0 0.0
        %341 = vmatprep.subr.mxu0 0.0
        %342 = vmatpush1.msra.mxu0 0.0
        %343 = vmatprep.subr.mxu0 0.0
        %344 = vmatpush1.msra.mxu0 0.0
        %345 = vmatprep.subr.mxu0 0.0
        %346 = vmatpush1.msra.mxu0 0.0
        %347 = vmatprep.subr.mxu0 0.0
        %348 = vmatpush1.msra.mxu0 0.0
        %349 = vmatprep.subr.mxu0 0.0
        %350 = vmatpush1.msra.mxu0 0.0
        %351 = vmatprep.subr.mxu0 0.0
        %352 = vmatpush1.msra.mxu0 0.0
        %353 = vmatprep.subr.mxu0 0.0
        %354 = vmatpush1.msra.mxu0 0.0
        %355 = vmatprep.subr.mxu0 0.0
        %356 = vmatpush1.msra.mxu0 0.0
        %357 = vmatprep.subr.mxu0 0.0
        %358 = vmatpush1.msra.mxu0 0.0
        %359 = vmatprep.subr.mxu0 0.0
        %360 = vmatpush1.msra.mxu0 0.0
        %361 = vmatprep.subr.mxu0 0.0
        %362 = vmatpush1.msra.mxu0 0.0
        %363 = vmatprep.subr.mxu0 %v331
        %364 = vmatpush1.msra.mxu0 %v328
        %365 = vmatprep.subr.mxu0 0.0
        %366 = vmatpush2.msra.mxu0 0.0
        %367 = vmatprep.subr.mxu0 0.0
        %368 = vmatpush2.msra.mxu0 0.0
        %369 = vmatprep.subr.mxu0 0.0
        %370 = vmatpush2.msra.mxu0 0.0
        %371 = vmatprep.subr.mxu0 0.0
        %372 = vmatpush2.msra.mxu0 0.0
        %373 = vmatprep.subr.mxu0 0.0
        %374 = vmatpush2.msra.mxu0 0.0
        %375 = vmatprep.subr.mxu0 0.0
        %376 = vmatpush2.msra.mxu0 0.0
        %377 = vmatprep.subr.mxu0 0.0
        %378 = vmatpush2.msra.mxu0 0.0
        %379 = vmatprep.subr.mxu0 0.0
        %380 = vmatpush2.msra.mxu0 0.0
        %381 = vmatprep.subr.mxu0 0.0
        %382 = vmatpush2.msra.mxu0 0.0
        %383 = vmatprep.subr.mxu0 0.0
        %384 = vmatpush2.msra.mxu0 0.0
        %385 = vmatprep.subr.mxu0 0.0
        %386 = vmatpush2.msra.mxu0 0.0
        %387 = vmatprep.subr.mxu0 0.0
        %388 = vmatpush2.msra.mxu0 0.0
        %389 = vmatprep.subr.mxu0 0.0
        %390 = vmatpush2.msra.mxu0 0.0
        %391 = vmatprep.subr.mxu0 0.0
        %392 = vmatpush2.msra.mxu0 0.0
        %393 = vmatprep.subr.mxu0 0.0
        %394 = vmatpush2.msra.mxu0 0.0
        %395 = vmatprep.subr.mxu0 0.0
        %396 = vmatpush2.msra.mxu0 0.0
        %397 = vmatprep.mubr.f32.mxu0 0.0
        %398 = vmatmul.mubr.f32.gmra.mxu0 %v315
        %v399 = vpop.f32.mrf.mxu0
        %v400 = vadd.f32 0.0, %v399
        %v401 = vpop.f32.mrf.mxu0
        %v402 = vadd.f32 0.0, %v401
        %403 = vmatprep.mubr.f32.mxu0 0.0
        %404 = vmatmul.mubr.f32.gmra.mxu0 %v318
        %v405 = vpop.f32.mrf.mxu0
        %v406 = vadd.f32 0.0, %v405
        %v407 = vpop.f32.mrf.mxu0
        %v408 = vadd.f32 0.0, %v407
        %409 = vmatprep.mubr.f32.mxu0 0.0
        %410 = vmatmul.mubr.f32.gmra.mxu0 %v321
        %v411 = vpop.f32.mrf.mxu0
        %v412 = vadd.f32 0.0, %v411
        %v413 = vpop.f32.mrf.mxu0
        %v414 = vadd.f32 0.0, %v413
        %415 = vmatprep.mubr.f32.mxu0 0.0
        %416 = vmatmul.mubr.f32.gmra.mxu0 %v324
        %v417 = vpop.f32.mrf.mxu0
        %v418 = vadd.f32 0.0, %v417
        %v419 = vpop.f32.mrf.mxu0
        %v420 = vadd.f32 0.0, %v419
        %421 = vdwg.mxu0
        %v422 = vmin.f32 %v400, %v412
        %v423 = vmin.f32 %v406, %v418
        %v424 = vmin.f32 %v422, %v423
        %v425 = vrot.slane %v424, 4
        %v426 = vmin.f32 %v424, %v425
        %v427 = vrot.slane %v426, 2
        %v428 = vmin.f32 %v426, %v427
        %v429 = vrot.slane %v428, 1
        %v430 = vmin.f32 %v428, %v429
        %v431 = vmin.f32 %v402, %v414
        %v432 = vmin.f32 %v408, %v420
        %v433 = vmin.f32 %v431, %v432
        %v434 = vrot.slane %v433, 4
        %v435 = vmin.f32 %v433, %v434
        %v436 = vrot.slane %v435, 2
        %v437 = vmin.f32 %v435, %v436
        %v438 = vrot.slane %v437, 1
        %v439 = vmin.f32 %v437, %v438
        %v440 = vlaneseq
        %v441 = vshrl.u32 %v440, 7
        %v442 = vadd.s32 %v441, 8
        %v443 = vadd.s32 %v441, 16
        %v444 = vadd.s32 %v441, 24
        %vm445 = vcmp.eq.f32.partialorder %v400, %v430
        %vm446 = vcmp.eq.f32.partialorder %v402, %v439
        %vm447 = vcmp.eq.f32.partialorder %v406, %v430
        %vm448 = vcmp.eq.f32.partialorder %v408, %v439
        %vm449 = vcmp.eq.f32.partialorder %v412, %v430
        %vm450 = vcmp.eq.f32.partialorder %v414, %v439
        %vm451 = vcmp.eq.f32.partialorder %v418, %v430
        %vm452 = vcmp.eq.f32.partialorder %v420, %v439
        %v453 = vsel %vm445, %v441, 32
        %v454 = vsel %vm446, %v441, 32
        %v455 = vsel %vm447, %v442, 32
        %v456 = vsel %vm448, %v442, 32
        %v457 = vsel %vm449, %v443, 32
        %v458 = vsel %vm450, %v443, 32
        %v459 = vsel %vm451, %v444, 32
        %v460 = vsel %vm452, %v444, 32
        %vm461 = vcmp.lt.s32.totalorder %v453, %v457
        %v462 = vsel %vm461, %v453, %v457
        %vm463 = vcmp.lt.s32.totalorder %v455, %v459
        %v464 = vsel %vm463, %v455, %v459
        %vm465 = vcmp.lt.s32.totalorder %v462, %v464
        %v466 = vsel %vm465, %v462, %v464
        %v467 = vrot.slane %v466, 4
        %vm468 = vcmp.lt.s32.totalorder %v466, %v467
        %v469 = vsel %vm468, %v466, %v467
        %v470 = vrot.slane %v469, 2
        %vm471 = vcmp.lt.s32.totalorder %v469, %v470
        %v472 = vsel %vm471, %v469, %v470
        %v473 = vrot.slane %v472, 1
        %vm474 = vcmp.lt.s32.totalorder %v472, %v473
        %v475 = vsel %vm474, %v472, %v473
        %vm476 = vcmp.lt.s32.totalorder %v454, %v458
        %v477 = vsel %vm476, %v454, %v458
        %vm478 = vcmp.lt.s32.totalorder %v456, %v460
        %v479 = vsel %vm478, %v456, %v460
        %vm480 = vcmp.lt.s32.totalorder %v477, %v479
        %v481 = vsel %vm480, %v477, %v479
        %v482 = vrot.slane %v481, 4
        %vm483 = vcmp.lt.s32.totalorder %v481, %v482
        %v484 = vsel %vm483, %v481, %v482
        %v485 = vrot.slane %v484, 2
        %vm486 = vcmp.lt.s32.totalorder %v484, %v485
        %v487 = vsel %vm486, %v484, %v485
        %v488 = vrot.slane %v487, 1
        %vm489 = vcmp.lt.s32.totalorder %v487, %v488
        %v490 = vsel %vm489, %v487, %v488
        %v491 = vcombine.low %v475, %v490
        %v493 = vunpack.c.l.s4 1966171168
        %v494 = vunpack.c.0.s8 %v493
        %v495 = vlaneseq
        %v496 = vshrl.u32 %v495, 7
        %v497 = vsub.s32 %v494, %v496
        %v498 = vrot.slane %v491, %v497
        %v500 = vunpack.c.l.s4 1966171168
        %v501 = vunpack.c.0.s8 %v500
        %v502 = vlaneseq
        %v503 = vshrl.u32 %v502, 7
        %v504 = vsub.s32 %v501, %v503
        %v505 = vrot.slane %v498, %v504
        %506 = vst.msk [vmem:[%s258] sm:$0x3] %vm303, %v505
        %vm507 = vcmp.eq.s32.totalorder %v453, %v475
        %vm508 = vcmp.eq.s32.totalorder %v454, %v490
        %vm509 = vcmp.eq.s32.totalorder %v455, %v475
        %vm510 = vcmp.eq.s32.totalorder %v456, %v490
        %vm511 = vcmp.eq.s32.totalorder %v457, %v475
        %vm512 = vcmp.eq.s32.totalorder %v458, %v490
        %vm513 = vcmp.eq.s32.totalorder %v459, %v475
        %vm514 = vcmp.eq.s32.totalorder %v460, %v490
        %v515 = vsel %vm507, 1, 0
        %v516 = vsel %vm508, 1, 0
        %v517 = vsel %vm509, 1, 0
        %v518 = vsel %vm510, 1, 0
        %v519 = vsel %vm511, 1, 0
        %v520 = vsel %vm512, 1, 0
        %v521 = vsel %vm513, 1, 0
        %v522 = vsel %vm514, 1, 0
        %v523 = vcvt.s32.f32 %v515
        %v524 = vcvt.s32.f32 %v516
        %v525 = vcvt.s32.f32 %v517
        %v526 = vcvt.s32.f32 %v518
        %v527 = vcvt.s32.f32 %v519
        %v528 = vcvt.s32.f32 %v520
        %v529 = vcvt.s32.f32 %v521
        %v530 = vcvt.s32.f32 %v522
        %v531 = vld [vmem:[%s2] sm:$0xf]
        %vm532 = vcmask 261120
        %v534 = vsel %vm532, %v531, 0
        %536 = vmatprep.subr.mxu0 0.0
        %537 = vmatpush1.msra.mxu0 0.0
        %538 = vmatprep.subr.mxu0 0.0
        %539 = vmatpush1.msra.mxu0 0.0
        %540 = vmatprep.subr.mxu0 0.0
        %541 = vmatpush1.msra.mxu0 0.0
        %542 = vmatprep.subr.mxu0 0.0
        %543 = vmatpush1.msra.mxu0 0.0
        %544 = vmatprep.subr.mxu0 0.0
        %545 = vmatpush1.msra.mxu0 0.0
        %546 = vmatprep.subr.mxu0 0.0
        %547 = vmatpush1.msra.mxu0 0.0
        %548 = vmatprep.subr.mxu0 0.0
        %549 = vmatpush1.msra.mxu0 0.0
        %550 = vmatprep.subr.mxu0 0.0
        %551 = vmatpush1.msra.mxu0 0.0
        %552 = vmatprep.subr.mxu0 0.0
        %553 = vmatpush1.msra.mxu0 0.0
        %554 = vmatprep.subr.mxu0 0.0
        %555 = vmatpush1.msra.mxu0 0.0
        %556 = vmatprep.subr.mxu0 0.0
        %557 = vmatpush1.msra.mxu0 0.0
        %558 = vmatprep.subr.mxu0 0.0
        %559 = vmatpush1.msra.mxu0 0.0
        %560 = vmatprep.subr.mxu0 %v530
        %561 = vmatpush1.msra.mxu0 %v529
        %562 = vmatprep.subr.mxu0 %v528
        %563 = vmatpush1.msra.mxu0 %v527
        %564 = vmatprep.subr.mxu0 %v526
        %565 = vmatpush1.msra.mxu0 %v525
        %566 = vmatprep.subr.mxu0 %v524
        %567 = vmatpush1.msra.mxu0 %v523
        %568 = vmatprep.subr.mxu0 0.0
        %569 = vmatpush2.msra.mxu0 0.0
        %570 = vmatprep.subr.mxu0 0.0
        %571 = vmatpush2.msra.mxu0 0.0
        %572 = vmatprep.subr.mxu0 0.0
        %573 = vmatpush2.msra.mxu0 0.0
        %574 = vmatprep.subr.mxu0 0.0
        %575 = vmatpush2.msra.mxu0 0.0
        %576 = vmatprep.subr.mxu0 0.0
        %577 = vmatpush2.msra.mxu0 0.0
        %578 = vmatprep.subr.mxu0 0.0
        %579 = vmatpush2.msra.mxu0 0.0
        %580 = vmatprep.subr.mxu0 0.0
        %581 = vmatpush2.msra.mxu0 0.0
        %582 = vmatprep.subr.mxu0 0.0
        %583 = vmatpush2.msra.mxu0 0.0
        %584 = vmatprep.subr.mxu0 0.0
        %585 = vmatpush2.msra.mxu0 0.0
        %586 = vmatprep.subr.mxu0 0.0
        %587 = vmatpush2.msra.mxu0 0.0
        %588 = vmatprep.subr.mxu0 0.0
        %589 = vmatpush2.msra.mxu0 0.0
        %590 = vmatprep.subr.mxu0 0.0
        %591 = vmatpush2.msra.mxu0 0.0
        %592 = vmatprep.subr.mxu0 0.0
        %593 = vmatpush2.msra.mxu0 0.0
        %594 = vmatprep.subr.mxu0 0.0
        %595 = vmatpush2.msra.mxu0 0.0
        %596 = vmatprep.subr.mxu0 0.0
        %597 = vmatpush2.msra.mxu0 0.0
        %598 = vmatprep.subr.mxu0 0.0
        %599 = vmatpush2.msra.mxu0 0.0
        %600 = vmatprep.mubr.f32.mxu0 0.0
        %601 = vmatmul.mubr.f32.gmra.mxu0 %v534
        %v602 = vpop.f32.mrf.mxu0
        %v603 = vadd.f32 0.0, %v602
        %v604 = vpop.f32.mrf.mxu0
        %v605 = vadd.f32 0.0, %v604
        %606 = vdwg.mxu0
        %v609 = vcombine.low %v603, %v605
        %611 = vst [vmem:[%s285] sm:$0xff] %v609
        %v612 = vmul.f32 %v294, %v294
        %v614 = vcombine.high %v612, %v612
        %vm616 = vcmask 1043456
        %v617 = vsel %vm616, %v612, 0.0
        %v618 = vrot.slane %v617, 4
        %v619 = vadd.f32 %v617, %v618
        %v620 = vrot.slane %v619, 2
        %v621 = vadd.f32 %v619, %v620
        %v622 = vrot.slane %v621, 1
        %v623 = vadd.f32 %v621, %v622
        %v624 = vsel %vm616, %v614, 0.0
        %v625 = vrot.slane %v624, 4
        %v626 = vadd.f32 %v624, %v625
        %v627 = vrot.slane %v626, 2
        %v628 = vadd.f32 %v626, %v627
        %v629 = vrot.slane %v628, 1
        %v630 = vadd.f32 %v628, %v629
        %v631 = vadd.f32 %v430, %v623
        %v632 = vadd.f32 %v439, %v630
        %v633 = vmax.f32 %v631, 0.0
        %v634 = vmax.f32 %v632, 0.0
        %vm635 = vcmask 1040384
        %v636 = vsel %vm635, %v633, 0.0
        %v637 = vsel %vm635, %v634, 0.0
        %v638 = vadd.f32 %v636, %v637
        %639 = vadd.xlane.f32.xlu0 %v638
        %v640 = vpop.xlane.xlu0 %639
        %v641 = vrot.slane %v640, 4
        %v642 = vadd.f32 %v640, %v641
        %v643 = vrot.slane %v642, 2
        %v644 = vadd.f32 %v642, %v643
        %v645 = vrot.slane %v644, 1
        %v646 = vadd.f32 %v644, %v645
        %s647 = vtos %v646
        %v648 = vlaneseq
        %v649 = vand.u32 %v648, 127
        %vm650 = vcmp.eq.s32.totalorder %v649, 0
        %v651 = vstv %s647
        %v652 = vsel %vm650, %v651, 0.0
        %653 = vst [vmem:[%s293] sm:$0x1] %v652
        %s654 = smul.u32 2, %s25
        %p655 = scmp.lt.s32.totalorder %s24, 1
        %s656 = scalar_select %p655, %s24, 1
        %p657 = scmp.lt.s32.totalorder %s654, 1
        %s658 = scalar_select %p657, %s654, 1
        %s659 = smul.addr %s656, 2
        %s660 = sadd.s32 %s658, %s659
        %s661 = smul.addr %s660, 4
        %s662 = scalar_lea.vmem %s3, %s661
        %s663 = sand.u32 %s140, 1
        %s664 = scalar_lea.sflag [#allocation4], %s663
        %s665 = sand.u32 %s140, 1
        %s666 = smul.addr %s665, 2
        %s667 = scalar_lea.vmem [#allocation3], %s666
        %p668 = scmp.lt.s32.totalorder %s24, 1
        %s669 = scalar_select %p668, %s24, 1
        %p670 = scmp.lt.s32.totalorder %s25, 0
        %s671 = scalar_select %p670, %s25, 0
        %s672 = sadd.s32 %s671, %s669
        %s673 = scalar_lea.vmem %s5, %s672
        // Predicated region
        $region33: #{vector_quantizer_forward.1} parent=31 // pred_check
          %p674 = pneg %p122
        $region34: #{vector_quantizer_forward.1} parent=31 // pred_check_branch
          %676 = sbr.rel (%p674) target = $region36
        $region35: #{vector_quantizer_forward.1} parent=31 // pred_region
          %s677 = smul.u32 2, %s25
        $region36: #{vector_quantizer_forward.1} parent=31 // pred_fallthru
          _
        // Predicated region
        $region37: #{vector_quantizer_forward.1} parent=31 // pred_check
          %p678 = pneg %p150
        $region38: #{vector_quantizer_forward.1} parent=31 // pred_check_branch
          %680 = sbr.rel (%p678) target = $region40
        $region39: #{vector_quantizer_forward.1} parent=31 // pred_region
          %s681 = smul.u32 2, %s25
          %s683 = ssub.s32 32, 32
          %684 = vsyncadd %s664, %s683
          %s685 = smul.addr %s24, 2
          %s686 = sadd.s32 %s681, %s685
          %s687 = smul.addr %s686, 16
          %s688 = scalar_lea.hbm %s4, %s687
          %s690 = sshll.u32 %s667, 4
          %s691 = int_to_ptr.vmem [resolvable:$true] %s690
          %693 = dma.vmem_to_hbm [thread:$0]  %s691, 32, %s688, %s664
        $region40: #{vector_quantizer_forward.1} parent=31 // pred_fallthru
          _
        // Predicated region
        $region41: #{vector_quantizer_forward.1} parent=31 // pred_check
          %p694 = pneg %p178
        $region42: #{vector_quantizer_forward.1} parent=31 // pred_check_branch
          %696 = sbr.rel (%p694) target = $region44
        $region43: #{vector_quantizer_forward.1} parent=31 // pred_region
          _
        $region44: #{vector_quantizer_forward.1} parent=31 // pred_fallthru
          _
      $region32: #{vector_quantizer_forward.1} parent=5 // pred_fallthru
        _
      %p697 = scmp.le.s32.totalorder 2, %s15
      // Predicated region
      $region45: #{vector_quantizer_forward.1} parent=5 // pred_check
        %p698 = pneg %p697
      $region46: #{vector_quantizer_forward.1} parent=5 // pred_check_branch
        %700 = sbr.rel (%p698) target = $region48
      $region47: #{vector_quantizer_forward.1} parent=5 // pred_region
        %s701 = ssub.s32 %s15, 2
        // Predicated region
        $region49: #{vector_quantizer_forward.1} parent=47 // pred_check
          %p702 = pneg %p128
        $region50: #{vector_quantizer_forward.1} parent=47 // pred_check_branch
          %704 = sbr.rel (%p702) target = $region52
        $region51: #{vector_quantizer_forward.1} parent=47 // pred_region
          %s705 = smul.u32 2, %s27
          %p706 = scmp.lt.s32.totalorder %s26, 1
          %s707 = scalar_select %p706, %s26, 1
          %p708 = scmp.lt.s32.totalorder %s705, 1
          %s709 = scalar_select %p708, %s705, 1
          %s710 = smul.addr %s707, 2
          %s711 = sadd.s32 %s709, %s710
          %s712 = smul.addr %s711, 4
          %s713 = scalar_lea.vmem %s3, %s712
        $region52: #{vector_quantizer_forward.1} parent=47 // pred_fallthru
          _
        // Predicated region
        $region53: #{vector_quantizer_forward.1} parent=47 // pred_check
          %p714 = pneg %p156
        $region54: #{vector_quantizer_forward.1} parent=47 // pred_check_branch
          %716 = sbr.rel (%p714) target = $region56
        $region55: #{vector_quantizer_forward.1} parent=47 // pred_region
          %s717 = sand.u32 %s141, 1
          %s718 = scalar_lea.sflag [#allocation4], %s717
          %s719 = sand.u32 %s141, 1
          %s720 = smul.addr %s719, 2
          %s721 = scalar_lea.vmem [#allocation3], %s720
          %722 = dma.done %s718, 32
        $region56: #{vector_quantizer_forward.1} parent=47 // pred_fallthru
          _
        // Predicated region
        $region57: #{vector_quantizer_forward.1} parent=47 // pred_check
          %p723 = pneg %p184
        $region58: #{vector_quantizer_forward.1} parent=47 // pred_check_branch
          %725 = sbr.rel (%p723) target = $region60
        $region59: #{vector_quantizer_forward.1} parent=47 // pred_region
          %p726 = scmp.lt.s32.totalorder %s26, 1
          %s727 = scalar_select %p726, %s26, 1
          %p728 = scmp.lt.s32.totalorder %s27, 0
          %s729 = scalar_select %p728, %s27, 0
          %s730 = sadd.s32 %s729, %s727
          %s731 = scalar_lea.vmem %s5, %s730
        $region60: #{vector_quantizer_forward.1} parent=47 // pred_fallthru
          _
      $region48: #{vector_quantizer_forward.1} parent=5 // pred_fallthru
        _
    $region6: #{vector_quantizer_forward.1} parent=1 // loop_footer
      %s19 = sadd.s32 1, %s15
    $region7: #{vector_quantizer_forward.1} parent=1 // loop_footer_branch
      %14 = sbr.rel target = $region3
    $region8: #{vector_quantizer_forward.1} parent=1 // loop_exit
      _
    %732 = vsyncpa [#allocation4], 1
    %s733 = scalar_lea.sflag [#allocation4], 1
    %734 = vsyncpa %s733, 1

</llo_original>
